<compile_context>
chip_gen: v7x
topology: tpu7x:2x2x1
jax: 0.10.0
libtpu: 0.0.40
codegen_flags: <defaults>
</compile_context>

<pallas_src>
import jax
import jax.numpy as jnp
from jax.experimental import pallas as pl
from jax.experimental.pallas import tpu as pltpu


def _round_up(x, m):
    return ((x + m - 1) // m) * m


# ----------------------------------------------------------------------------
# Pallas kernel: one (tm, tn) f32 output tile, reduction tiled over k.
#   feat_ref: [tm, tk] f32 activations
#   w_ref:    [tk, tn] bf16/f32 weight, pre-transposed to [K, N]
#   b_ref:    [1,  tn] f32 bias
#   out_ref:  [tm, tn] f32 logits; doubles as the accumulator across k
# ----------------------------------------------------------------------------
def _fc_kernel(feat_ref, w_ref, b_ref, out_ref):
    k = pl.program_id(2)

    @pl.when(k == 0)
    def _():
        # Bias written exactly once as the accumulator init.
        out_ref[...] = jnp.broadcast_to(b_ref[...], out_ref.shape)

    # Cast the activation tile to the weight dtype in VMEM (cheap VPU op),
    # then MXU matmul with f32 accumulation.  [tk, tn] RHS feeds the MXU
    # directly (no transpose).
    out_ref[...] += jnp.dot(
        feat_ref[...].astype(w_ref.dtype),
        w_ref[...],
        preferred_element_type=jnp.float32,
    )


# ----------------------------------------------------------------------------
# One-time (param-load) preparation of an nn.Linear for the Pallas GEMM.
# ----------------------------------------------------------------------------
def prepare_linear(weight, bias, *, use_bf16=True, tn=512, tk=2048):
    """weight: [dim_out, input_dim] (PyTorch layout), bias: [dim_out].

    Pre-transposes the weight to [K, N], casts it to bf16 (optional) and
    zero-pads weight/bias to (8,128)-aligned tile multiples.  Done once,
    outside the per-forward hot path.
    """
    dim_out, d = weight.shape
    d_pad = _round_up(d, 128)
    o_pad = _round_up(dim_out, 128)
    tk = min(tk, d_pad)
    tn = min(tn, o_pad)
    d_pad = _round_up(d_pad, tk)
    o_pad = _round_up(o_pad, tn)

    w_dtype = jnp.bfloat16 if use_bf16 else jnp.float32
    w_kn = jnp.zeros((d_pad, o_pad), w_dtype).at[:d, :dim_out].set(
        weight.T.astype(w_dtype))
    b_p = jnp.zeros((1, o_pad), jnp.float32).at[0, :dim_out].set(
        bias.astype(jnp.float32))
    return {"w_kn": w_kn, "b": b_p, "in_dim": d, "dim_out": dim_out,
            "tk": tk, "tn": tn}


# ----------------------------------------------------------------------------
# Hot path: feat [N, D] f32  ->  logits [N, dim_out] f32
# ----------------------------------------------------------------------------
def linear_fc_pallas(feat, prep, *, tm=512):
    n, d = feat.shape
    assert d == prep["in_dim"], "feature dim mismatch"
    d_pad, o_pad = prep["w_kn"].shape
    tk, tn = prep["tk"], prep["tn"]
    dim_out = prep["dim_out"]

    n_pad = _round_up(n, 8)
    tm = min(tm, n_pad)
    n_pad = _round_up(n_pad, tm)

    # Fast path: skip the pad/copy of feat when it is already tile-aligned.
    if (n_pad, d_pad) != (n, d):
        feat_in = jnp.zeros((n_pad, d_pad), feat.dtype).at[:n, :d].set(feat)
    else:
        feat_in = feat

    grid = (n_pad // tm, o_pad // tn, d_pad // tk)

    bytes_accessed = int(
        feat_in.size * feat_in.dtype.itemsize
        + prep["w_kn"].size * prep["w_kn"].dtype.itemsize
        + prep["b"].size * 4
        + n_pad * o_pad * 4
    )

    out_padded = pl.pallas_call(
        _fc_kernel,
        out_shape=jax.ShapeDtypeStruct((n_pad, o_pad), jnp.float32),
        grid_spec=pltpu.PrefetchScalarGridSpec(
            num_scalar_prefetch=0,
            grid=grid,
            in_specs=[
                pl.BlockSpec((tm, tk), lambda i, j, k: (i, k)),   # feat tile
                pl.BlockSpec((tk, tn), lambda i, j, k: (k, j)),   # [K,N] weight tile
                pl.BlockSpec((1, tn), lambda i, j, k: (0, j)),    # bias tile
            ],
            out_specs=pl.BlockSpec((tm, tn), lambda i, j, k: (i, j)),
        ),
        compiler_params=pltpu.CompilerParams(
            dimension_semantics=("parallel", "parallel", "arbitrary"),
            vmem_limit_bytes=32 * 1024 * 1024,
        ),
        cost_estimate=pl.CostEstimate(
            flops=2 * n_pad * d_pad * o_pad,
            transcendentals=0,
            bytes_accessed=bytes_accessed),
    )(feat_in, prep["w_kn"], prep["b"])

    if (n_pad, o_pad) != (n, dim_out):
        out_padded = out_padded[:n, :dim_out]
    return out_padded


# ----------------------------------------------------------------------------
# Frozen backbone stub (plain JAX glue): NCHW -> pooled [N, C] -> feat [N, D]
# ----------------------------------------------------------------------------
def pooled_features(x):
    return jnp.mean(x, axis=(2, 3))  # [N, C]


# ----------------------------------------------------------------------------
# LinearHead parameter prep + forward
# ----------------------------------------------------------------------------
def prepare_head(raw, *, use_bf16=True):
    """One-time prep (analogue of module __init__ / state-dict load)."""
    prep = {
        "net_w": raw["net_w"],  # frozen backbone projection (feat path), f32
        "fc": prepare_linear(raw["fc_w"], raw["fc_b"], use_bf16=use_bf16),
    }
    # return_feat=False fast path: fold the frozen backbone projection into the
    # head offline.  out = pooled @ (net_w @ fc_w.T) + b, done as one GEMM.
    w_eff_oi = raw["fc_w"] @ raw["net_w"].T          # [dim_out, C] PyTorch layout
    prep["fused"] = prepare_linear(w_eff_oi, raw["fc_b"], use_bf16=use_bf16)
    return prep


def linear_head_forward(x, prep, return_feat=False):
    # linear_eval=True in PyTorch only disables gradients for `net`; forward
    # math is identical, so no special handling is needed here.
    pooled = pooled_features(x)                                  # [N, C]
    if not return_feat and "fused" in prep:
        # Single fused GEMM: skips the intermediate [N, input_dim] round trip.
        return linear_fc_pallas(pooled, prep["fused"])           # [N, dim_out]
    feat = pooled @ prep["net_w"]                                # [N, input_dim]
    out = linear_fc_pallas(feat, prep["fc"])                     # [N, dim_out]
    if return_feat:
        return out, feat
    return out


def init_params(key, in_channels, input_dim, dim_out, linear_eval=True):
    k_net, k_w, k_b = jax.random.split(key, 3)
    net_w = jax.random.normal(k_net, (in_channels, input_dim), jnp.float32) * 0.1
    if linear_eval:
        # Matches LinearHead.__init__: fc.weight.data.zero_(); fc.bias.data.zero_()
        fc_w = jnp.zeros((dim_out, input_dim), jnp.float32)
        fc_b = jnp.zeros((dim_out,), jnp.float32)
    else:
        fc_w = jax.random.normal(k_w, (dim_out, input_dim), jnp.float32) * 0.05
        fc_b = jax.random.normal(k_b, (dim_out,), jnp.float32) * 0.05
    return {"net_w": net_w, "fc_w": fc_w, "fc_b": fc_b}


def _ref_linear(feat, weight_oi, bias, use_bf16):
    if use_bf16:
        feat = feat.astype(jnp.bfloat16).astype(jnp.float32)
        weight_oi = weight_oi.astype(jnp.bfloat16).astype(jnp.float32)
    return feat @ weight_oi.T + bias


if __name__ == "__main__":
    N, C, H, W = 2, 4, 16, 16
    INPUT_DIM = 32
    DIM_OUT = 128

    key = jax.random.PRNGKey(0)
    kx, kp = jax.random.split(key)
    x = jax.random.normal(kx, (N, C, H, W), jnp.float32)

    # --- linear_eval=True (fc zero-initialized): output must be exactly zero --
    raw_le = init_params(kp, C, INPUT_DIM, DIM_OUT, linear_eval=True)
    prep_le = prepare_head(raw_le, use_bf16=True)
    out_le, feat_le = linear_head_forward(x, prep_le, return_feat=True)
    out_le = jax.block_until_ready(out_le)
    assert out_le.shape == (N, DIM_OUT)
    assert feat_le.shape == (N, INPUT_DIM)
    assert jnp.allclose(out_le, 0.0), "linear_eval head must output zeros"
    out_le_fused = jax.block_until_ready(linear_head_forward(x, prep_le))
    assert out_le_fused.shape == (N, DIM_OUT)
    assert jnp.allclose(out_le_fused, 0.0), "fused linear_eval head must output zeros"

    # --- linear_eval=False (non-trivial weights): verify both Pallas paths ----
    raw_tr = init_params(kp, C, INPUT_DIM, DIM_OUT, linear_eval=False)
    prep_tr = prepare_head(raw_tr, use_bf16=True)
    pooled = pooled_features(x)
    feat_ref = pooled @ raw_tr["net_w"]

    # (a) separate feat -> fc path (return_feat=True)
    out_tr, feat_out = linear_head_forward(x, prep_tr, return_feat=True)
    out_tr = jax.block_until_ready(out_tr)
    ref_bf16 = _ref_linear(feat_ref, raw_tr["fc_w"], raw_tr["fc_b"], use_bf16=True)
    ref_f32 = _ref_linear(feat_ref, raw_tr["fc_w"], raw_tr["fc_b"], use_bf16=False)
    assert out_tr.shape == (N, DIM_OUT)
    assert jnp.allclose(feat_out, feat_ref, atol=1e-5, rtol=1e-5)
    assert jnp.allclose(out_tr, ref_bf16, atol=1e-4, rtol=1e-4), "Pallas fc mismatch (bf16 ref)"
    assert jnp.allclose(out_tr, ref_f32, atol=2e-2, rtol=2e-2), "Pallas fc mismatch (f32 ref)"

    # (b) fused single-GEMM path (return_feat=False)
    out_fused = jax.block_until_ready(linear_head_forward(x, prep_tr))
    w_eff_oi = raw_tr["fc_w"] @ raw_tr["net_w"].T
    ref_fused_bf16 = _ref_linear(pooled, w_eff_oi, raw_tr["fc_b"], use_bf16=True)
    ref_fused_f32 = _ref_linear(pooled, w_eff_oi, raw_tr["fc_b"], use_bf16=False)
    assert out_fused.shape == (N, DIM_OUT)
    assert jnp.allclose(out_fused, ref_fused_bf16, atol=1e-4, rtol=1e-4), "fused mismatch (bf16 ref)"
    assert jnp.allclose(out_fused, ref_fused_f32, atol=2e-2, rtol=2e-2), "fused mismatch (f32 ref)"

    # (c) f32-operand path (use_bf16=False): exact vs f32 reference
    prep_f32 = prepare_head(raw_tr, use_bf16=False)
    out_f32, _ = linear_head_forward(x, prep_f32, return_feat=True)
    out_f32 = jax.block_until_ready(out_f32)
    assert jnp.allclose(out_f32, ref_f32, atol=1e-4, rtol=1e-4), "Pallas f32 fc mismatch"

    print("KERNEL_OK")
</pallas_src>

<mosaic_0001>
module attributes {stable_mosaic.version = 11 : i64} {
  func.func @_fc_kernel(%arg0: i32, %arg1: i32, %arg2: i32, %arg3: memref<8x128xf32, #tpu.memory_space<vmem>>, %arg4: memref<128x128xbf16, #tpu.memory_space<vmem>>, %arg5: memref<1x128xf32, #tpu.memory_space<vmem>>, %arg6: memref<8x128xf32, #tpu.memory_space<vmem>>) attributes {dimension_semantics = [#tpu.dimension_semantics<parallel>, #tpu.dimension_semantics<parallel>, #tpu.dimension_semantics<arbitrary>], iteration_bounds = array<i64: 1, 1, 1>, scalar_prefetch = 0 : i64, scratch_operands = 0 : i64, tpu.core_type = #tpu.core_type<tc>, window_params = [{transform_indices = @transform_0, window_bounds = array<i64: 8, 128>}, {transform_indices = @transform_1, window_bounds = array<i64: 128, 128>}, {transform_indices = @transform_2, window_bounds = array<i64: 1, 128>}, {transform_indices = @transform_3, window_bounds = array<i64: 8, 128>}]} {
    %c0_i32 = arith.constant 0 : i32
    %0 = arith.cmpi eq, %arg2, %c0_i32 : i32
    %1 = arith.extui %0 : i1 to i32
    %c0_i32_0 = arith.constant 0 : i32
    %2 = arith.cmpi ne, %1, %c0_i32_0 : i32
    scf.if %2 {
      %c0_8 = arith.constant 0 : index
      %c0_9 = arith.constant 0 : index
      %10 = vector.load %arg5[%c0_8, %c0_9] : memref<1x128xf32, #tpu.memory_space<vmem>>, vector<1x128xf32>
      %11 = vector.shape_cast %10 : vector<1x128xf32> to vector<1x128xf32>
      %12 = vector.broadcast %11 : vector<1x128xf32> to vector<8x128xf32>
      %c0_10 = arith.constant 0 : index
      %c0_11 = arith.constant 0 : index
      %13 = vector.load %arg6[%c0_10, %c0_11] : memref<8x128xf32, #tpu.memory_space<vmem>>, vector<8x128xf32>
      tpu.vector_store %arg6[%c0_10, %c0_11], %12 {strides = array<i32>} : memref<8x128xf32, #tpu.memory_space<vmem>>, vector<8x128xf32>,
    } else {
    }
    %c0 = arith.constant 0 : index
    %c0_1 = arith.constant 0 : index
    %3 = vector.load %arg6[%c0, %c0_1] : memref<8x128xf32, #tpu.memory_space<vmem>>, vector<8x128xf32>
    %c0_2 = arith.constant 0 : index
    %c0_3 = arith.constant 0 : index
    %4 = vector.load %arg3[%c0_2, %c0_3] : memref<8x128xf32, #tpu.memory_space<vmem>>, vector<8x128xf32>
    %5 = arith.truncf %4 : vector<8x128xf32> to vector<8x128xbf16>
    %c0_4 = arith.constant 0 : index
    %c0_5 = arith.constant 0 : index
    %6 = vector.load %arg4[%c0_4, %c0_5] : memref<128x128xbf16, #tpu.memory_space<vmem>>, vector<128x128xbf16>
    %cst = arith.constant dense<0.000000e+00> : vector<8x128xf32>
    %7 = tpu.matmul %5, %6, %cst {dimension_numbers = #tpu.dot_dimension_numbers<[1], [0], [0], [1], [0, 0, 1, 1], [], []>} : vector<8x128xbf16>, vector<128x128xbf16>, vector<8x128xf32> -> vector<8x128xf32>
    %8 = arith.addf %3, %7 : vector<8x128xf32>
    %c0_6 = arith.constant 0 : index
    %c0_7 = arith.constant 0 : index
    %9 = vector.load %arg6[%c0_6, %c0_7] : memref<8x128xf32, #tpu.memory_space<vmem>>, vector<8x128xf32>
    tpu.vector_store %arg6[%c0_6, %c0_7], %8 {strides = array<i32>} : memref<8x128xf32, #tpu.memory_space<vmem>>, vector<8x128xf32>,
    return
  }
  func.func @transform_0(%arg0: i32, %arg1: i32, %arg2: i32) -> (i32, i32) {
    %c0_i32 = arith.constant 0 : i32
    return %arg0, %arg2 : i32, i32
  }
  func.func @transform_1(%arg0: i32, %arg1: i32, %arg2: i32) -> (i32, i32) {
    %c0_i32 = arith.constant 0 : i32
    return %arg2, %arg1 : i32, i32
  }
  func.func @transform_2(%arg0: i32, %arg1: i32, %arg2: i32) -> (i32, i32) {
    %c0_i32 = arith.constant 0 : i32
    %c0_i32_0 = arith.constant 0 : i32
    return %c0_i32, %arg1 : i32, i32
  }
  func.func @transform_3(%arg0: i32, %arg1: i32, %arg2: i32) -> (i32, i32) {
    %c0_i32 = arith.constant 0 : i32
    return %arg0, %arg1 : i32, i32
  }
}

</mosaic_0001>

<llo_original>
// kernel: tpu_custom_call.1
$region0: #{tpu_custom_call.1}
  #allocation0 [shape = 'u32[]', space=smem, size = 0x4, offset = 0x4, fixed_abs, tag = 'smem constant byte address 0x4 - core index']
  #allocation1 [shape = 'u32[144,128]{1,0:T(1,128)}', space=vmem, size = 0x12000, scoped, tag = 'internal scratch']
  %s0 = inlined_call_operand.hbm [shape: f32[8,128], index: 0, kind: input, shape index: {}]
  %s1 = inlined_call_operand.hbm [shape: bf16[128,128], index: 1, kind: input, shape index: {}]
  %s2 = inlined_call_operand.vmem [shape: f32[1,128], index: 2, kind: input, shape index: {}]
  %s3 = inlined_call_operand.hbm [shape: f32[8,128], index: 3, kind: output, shape index: {}]
  %s4 = sld [smem:[#allocation0]]
  $region34: #{tpu_custom_call.1} parent=0
    _
  %s6 = ssub.s32 1, %s4
  %s7 = scalar_select 0, %s6, %s4
  $region1: #{tpu_custom_call.1} parent=0
    #allocation2 [shape = 'u8[4096]{0}', space=vmem, size = 0x1000, scoped, tag = 'input window, operand 0, single buffered']
    #allocation3 [shape = 's32[1]{0}', space=sflag, size = 0x4, scoped, tag = 'scoped memory for tpu_custom_call.1']
    #allocation4 [shape = 's32[1]{0}', space=sflag, size = 0x4, scoped, tag = 'scoped memory for tpu_custom_call.1']
    #allocation5 [shape = 'u8[32768]{0}', space=vmem, size = 0x8000, scoped, tag = 'input window, operand 1, single buffered']
    #allocation6 [shape = 's32[1]{0}', space=sflag, size = 0x4, scoped, tag = 'scoped memory for tpu_custom_call.1']
    #allocation7 [shape = 'u8[4096]{0}', space=vmem, size = 0x1000, scoped, tag = 'output window, operand 0, single buffered']
    %8 = vsyncpa [#allocation3], 0
    %9 = vsyncpa [#allocation6], 0
    %10 = vsyncpa [#allocation4], 0
    // Predicated region
    $region2: #{tpu_custom_call.1} parent=1 // pred_check
      _
    $region3: #{tpu_custom_call.1} parent=1 // pred_check_branch
      %12 = sbr.rel (0) target = $region5
    $region4: #{tpu_custom_call.1} parent=1 // pred_region
      %s14 = ssub.s32 128, 128
      %15 = vsyncadd [#allocation3], %s14
      %s17 = sshll.u32 [#allocation2], 4
      %s18 = int_to_ptr.vmem [resolvable:$true] %s17
      %20 = dma.hbm_to_vmem [thread:$0]  %s0, 128, %s18, [#allocation3]
    $region5: #{tpu_custom_call.1} parent=1 // pred_fallthru
      _
    // Predicated region
    $region6: #{tpu_custom_call.1} parent=1 // pred_check
      _
    $region7: #{tpu_custom_call.1} parent=1 // pred_check_branch
      %22 = sbr.rel (0) target = $region9
    $region8: #{tpu_custom_call.1} parent=1 // pred_region
      %s24 = ssub.s32 1024, 1024
      %25 = vsyncadd [#allocation6], %s24
      %s26 = sshll.u32 [#allocation5], 4
      %s27 = int_to_ptr.vmem [resolvable:$true] %s26
      %32 = dma.hbm_to_vmem [thread:$0]  %s1, 1024, %s27, [#allocation6], 64, 64, 4
    $region9: #{tpu_custom_call.1} parent=1 // pred_fallthru
      _
    // Predicated region
    $region10: #{tpu_custom_call.1} parent=1 // pred_check
      _
    $region11: #{tpu_custom_call.1} parent=1 // pred_check_branch
      %34 = sbr.rel (0) target = $region13
    $region12: #{tpu_custom_call.1} parent=1 // pred_region
      _
    $region13: #{tpu_custom_call.1} parent=1 // pred_fallthru
      _
    // Predicated region
    $region14: #{tpu_custom_call.1} parent=1 // pred_check
      _
    $region15: #{tpu_custom_call.1} parent=1 // pred_check_branch
      %36 = sbr.rel (0) target = $region17
    $region16: #{tpu_custom_call.1} parent=1 // pred_region
      %37 = dma.done [#allocation3], 128
    $region17: #{tpu_custom_call.1} parent=1 // pred_fallthru
      _
    // Predicated region
    $region18: #{tpu_custom_call.1} parent=1 // pred_check
      _
    $region19: #{tpu_custom_call.1} parent=1 // pred_check_branch
      %39 = sbr.rel (0) target = $region21
    $region20: #{tpu_custom_call.1} parent=1 // pred_region
      %40 = dma.done [#allocation6], 1024
    $region21: #{tpu_custom_call.1} parent=1 // pred_fallthru
      _
    %p42 = scmp.eq.s32.totalorder 0, 0
    // Predicated region
    $region22: #{tpu_custom_call.1} parent=1 // pred_check
      %p43 = pneg %p42
    $region23: #{tpu_custom_call.1} parent=1 // pred_check_branch
      %45 = sbr.rel (%p43) target = $region25
    $region24: #{tpu_custom_call.1} parent=1 // pred_region
      %v46 = vld [vmem:[%s2] sm:$0x1]
      %v48 = vlaneseq
      %v49 = vshrl.u32 %v48, 7
      %v50 = vsub.s32 0, %v49
      %v51 = vrot.slane %v46, %v50
      %53 = vst [vmem:[#allocation7] sm:$0xff] %v51
    $region25: #{tpu_custom_call.1} parent=1 // pred_fallthru
      _
    %v54 = vld [vmem:[#allocation7] sm:$0xff]
    %v55 = vld [vmem:[#allocation2] sm:$0xff]
    %v56 = vpack.c.bf16 %v55, %v55
    %v57 = vld [vmem:[#allocation5] sm:$0xf]
    %v58 = vld [vmem:[#allocation5 + $0x4] sm:$0xf]
    %v59 = vld [vmem:[#allocation5 + $0x8] sm:$0xf]
    %v60 = vld [vmem:[#allocation5 + $0xc] sm:$0xf]
    %v61 = vld [vmem:[#allocation5 + $0x10] sm:$0xf]
    %v62 = vld [vmem:[#allocation5 + $0x14] sm:$0xf]
    %v63 = vld [vmem:[#allocation5 + $0x18] sm:$0xf]
    %v64 = vld [vmem:[#allocation5 + $0x1c] sm:$0xf]
    %v65 = vld [vmem:[#allocation5 + $0x20] sm:$0xf]
    %v66 = vld [vmem:[#allocation5 + $0x24] sm:$0xf]
    %v67 = vld [vmem:[#allocation5 + $0x28] sm:$0xf]
    %v68 = vld [vmem:[#allocation5 + $0x2c] sm:$0xf]
    %v69 = vld [vmem:[#allocation5 + $0x30] sm:$0xf]
    %v70 = vld [vmem:[#allocation5 + $0x34] sm:$0xf]
    %v71 = vld [vmem:[#allocation5 + $0x38] sm:$0xf]
    %v72 = vld [vmem:[#allocation5 + $0x3c] sm:$0xf]
    %v89 = vunpack.c.l.b16 %v57
    %v90 = vunpack.c.l.b16 %v58
    %v91 = vunpack.c.l.b16 %v59
    %v92 = vunpack.c.l.b16 %v60
    %v93 = vunpack.c.l.b16 %v61
    %v94 = vunpack.c.l.b16 %v62
    %v95 = vunpack.c.l.b16 %v63
    %v96 = vunpack.c.l.b16 %v64
    %v97 = vunpack.c.l.b16 %v65
    %v98 = vunpack.c.l.b16 %v66
    %v99 = vunpack.c.l.b16 %v67
    %v100 = vunpack.c.l.b16 %v68
    %v101 = vunpack.c.l.b16 %v69
    %v102 = vunpack.c.l.b16 %v70
    %v103 = vunpack.c.l.b16 %v71
    %v104 = vunpack.c.l.b16 %v72
    %v105 = vpack.c.b16 %v90, %v89
    %v106 = vpack.c.b16 %v92, %v91
    %v107 = vpack.c.b16 %v94, %v93
    %v108 = vpack.c.b16 %v96, %v95
    %v109 = vpack.c.b16 %v98, %v97
    %v110 = vpack.c.b16 %v100, %v99
    %v111 = vpack.c.b16 %v102, %v101
    %v112 = vpack.c.b16 %v104, %v103
    %121 = vmatprep.subr.bf16.mxu0 0
    %122 = vmatpush1.bf16.msra.mxu0 %v105
    %123 = vmatprep.subr.bf16.mxu0 0
    %124 = vmatpush1.bf16.msra.mxu0 %v106
    %125 = vmatprep.subr.bf16.mxu0 0
    %126 = vmatpush1.bf16.msra.mxu0 %v107
    %127 = vmatprep.subr.bf16.mxu0 0
    %128 = vmatpush1.bf16.msra.mxu0 %v108
    %129 = vmatprep.subr.bf16.mxu0 0
    %130 = vmatpush1.bf16.msra.mxu0 %v109
    %131 = vmatprep.subr.bf16.mxu0 0
    %132 = vmatpush1.bf16.msra.mxu0 %v110
    %133 = vmatprep.subr.bf16.mxu0 0
    %134 = vmatpush1.bf16.msra.mxu0 %v111
    %135 = vmatprep.subr.bf16.mxu0 0
    %136 = vmatpush1.bf16.msra.mxu0 %v112
    %137 = vmatprep.subr.bf16.mxu0 0
    %138 = vmatpush1.bf16.msra.mxu0 0
    %139 = vmatprep.subr.bf16.mxu0 0
    %140 = vmatpush1.bf16.msra.mxu0 0
    %141 = vmatprep.subr.bf16.mxu0 0
    %142 = vmatpush1.bf16.msra.mxu0 0
    %143 = vmatprep.subr.bf16.mxu0 0
    %144 = vmatpush1.bf16.msra.mxu0 0
    %145 = vmatprep.subr.bf16.mxu0 0
    %146 = vmatpush1.bf16.msra.mxu0 0
    %147 = vmatprep.subr.bf16.mxu0 0
    %148 = vmatpush1.bf16.msra.mxu0 0
    %149 = vmatprep.subr.bf16.mxu0 0
    %150 = vmatpush1.bf16.msra.mxu0 0
    %151 = vmatprep.subr.bf16.mxu0 0
    %152 = vmatpush1.bf16.msra.mxu0 0
    %153 = vmatprep.mubr.bf16.mxu0 0
    %154 = vmatmul.mubr.bf16.gmra.mrb[0].mxu0 %v56
    %v155 = vpop.f32.mrb[0].mxu0
    %v156 = vadd.f32 0.0, %v155
    %v157 = vpop.f32.mrb[0].mxu0
    %v158 = vpop.f32.mrb[0].mxu0
    %v159 = vpop.f32.mrb[0].mxu0
    %160 = vdwg.mxu0
    %v161 = vadd.f32 %v54, %v156
    %162 = vst [vmem:[#allocation7] sm:$0xff] %v161
    // Predicated region
    $region26: #{tpu_custom_call.1} parent=1 // pred_check
      _
    $region27: #{tpu_custom_call.1} parent=1 // pred_check_branch
      %164 = sbr.rel (0) target = $region29
    $region28: #{tpu_custom_call.1} parent=1 // pred_region
      %s166 = ssub.s32 128, 128
      %167 = vsyncadd [#allocation4], %s166
      %s169 = sshll.u32 [#allocation7], 4
      %s170 = int_to_ptr.vmem [resolvable:$true] %s169
      %172 = dma.vmem_to_hbm [thread:$0]  %s170, 128, %s3, [#allocation4]
    $region29: #{tpu_custom_call.1} parent=1 // pred_fallthru
      _
    // Predicated region
    $region30: #{tpu_custom_call.1} parent=1 // pred_check
      _
    $region31: #{tpu_custom_call.1} parent=1 // pred_check_branch
      %174 = sbr.rel (0) target = $region33
    $region32: #{tpu_custom_call.1} parent=1 // pred_region
      %175 = dma.done [#allocation4], 128
    $region33: #{tpu_custom_call.1} parent=1 // pred_fallthru
      _
    %176 = vsyncpa [#allocation3], 1
    %177 = vsyncpa [#allocation6], 1
    %178 = vsyncpa [#allocation4], 1

</llo_original>
